<compile_context>
chip_gen: v7x
topology: tpu7x:2x2x1
jax: 0.10.0
libtpu: 0.0.40
codegen_flags: <defaults>
</compile_context>

<pallas_src>
import functools

import jax
import jax.numpy as jnp
from jax.experimental import pallas as pl
from jax.experimental.pallas import tpu as pltpu

MARGIN = 2.0          # ContrastiveLoss default margin
PAIRWISE_EPS = 1e-6   # F.pairwise_distance default eps (added to the difference)


def _round_up(x, m):
    return (x + m - 1) // m * m


# ------------------------------------------------------------------
# Fused ContrastiveLoss reduction kernel.
# Grid: (ceil(B/tb),) over the batch; output (1,1) block is the accumulator.
# ------------------------------------------------------------------
def _contrastive_loss_kernel(o1_ref, o2_ref, lbl_ref, loss_ref, *,
                             margin, eps, n_valid, tb):
    i = pl.program_id(0)

    @pl.when(i == 0)
    def _init():
        loss_ref[...] = jnp.zeros_like(loss_ref)

    # F.pairwise_distance: ||x1 - x2 + eps||_2
    diff = (o1_ref[...] - o2_ref[...]) + eps            # (tb, D) f32
    d2 = jnp.sum(diff * diff, axis=1, keepdims=True)    # (tb, 1) = distance^2
    d = jnp.sqrt(d2)
    lbl = lbl_ref[...]                                  # (tb, 1)
    hinge = jnp.maximum(margin - d, 0.0)
    term = (1.0 - lbl) * d2 + lbl * hinge * hinge       # (tb, 1)

    # Mask rows that only exist because the batch was padded to a multiple of tb.
    row = jax.lax.broadcasted_iota(jnp.int32, term.shape, 0) + i * tb
    term = jnp.where(row < n_valid, term, 0.0)

    loss_ref[...] += jnp.sum(term, axis=0, keepdims=True)

    @pl.when(i == pl.num_programs(0) - 1)
    def _finalize():
        loss_ref[...] = loss_ref[...] * (1.0 / n_valid)  # mean over the real batch


def contrastive_loss(output1, output2, label, margin=MARGIN):
    """output1, output2: (B, D); label: (B,).  Returns scalar f32 loss."""
    B, D = output1.shape
    o1 = output1.astype(jnp.float32)
    o2 = output2.astype(jnp.float32)
    lbl = label.reshape(B, 1).astype(jnp.float32)

    # Batch tile: multiple of 8 sublanes, capped so the double-buffered tiles stay tiny.
    tb = min(1024, _round_up(B, 8))
    Bp = _round_up(B, tb)
    if Bp != B:
        pad = ((0, Bp - B), (0, 0))
        o1 = jnp.pad(o1, pad)
        o2 = jnp.pad(o2, pad)
        lbl = jnp.pad(lbl, pad)

    grid = (Bp // tb,)
    kern = functools.partial(_contrastive_loss_kernel,
                             margin=float(margin), eps=PAIRWISE_EPS,
                             n_valid=B, tb=tb)

    loss = pl.pallas_call(
        kern,
        out_shape=jax.ShapeDtypeStruct((1, 1), jnp.float32),
        grid=grid,
        in_specs=[pl.BlockSpec((tb, D), lambda i: (i, 0)),
                  pl.BlockSpec((tb, D), lambda i: (i, 0)),
                  pl.BlockSpec((tb, 1), lambda i: (i, 0))],
        out_specs=pl.BlockSpec((1, 1), lambda i: (0, 0)),
        compiler_params=pltpu.CompilerParams(
            dimension_semantics=("arbitrary",)),   # reduction axis: output block is resident
    )(o1, o2, lbl)
    return loss[0, 0]


# TODO(synk): the upstream Siamese embedder (conv stack + MLP) that produces output1/output2
#             is not part of the spec module (ContrastiveLoss) and is out of scope here.


if __name__ == "__main__":
    # Small shapes consistent with the module: embeddings from the Siamese net are 5-dim.
    B, D = 6, 5
    key = jax.random.PRNGKey(0)
    k1, k2, k3 = jax.random.split(key, 3)
    output1 = jax.random.normal(k1, (B, D), jnp.float32)
    output2 = jax.random.normal(k2, (B, D), jnp.float32)
    label = (jax.random.uniform(k3, (B,)) > 0.5).astype(jnp.float32)

    loss = jax.jit(contrastive_loss)(output1, output2, label)
    jax.block_until_ready(loss)

    # Pure-JAX reference of the spec module.
    diff = output1 - output2 + PAIRWISE_EPS
    d = jnp.sqrt(jnp.sum(diff * diff, axis=1))
    ref = jnp.mean((1.0 - label) * d ** 2
                   + label * jnp.maximum(MARGIN - d, 0.0) ** 2)

    assert loss.shape == ()
    assert bool(jnp.isfinite(loss))
    assert bool(jnp.allclose(loss, ref, rtol=1e-5, atol=1e-6))
    print("KERNEL_OK")
</pallas_src>

<mosaic_0001>
module attributes {stable_mosaic.version = 11 : i64} {
  func.func @_contrastive_loss_kernel(%arg0: i32, %arg1: memref<8x5xf32, #tpu.memory_space<vmem>>, %arg2: memref<8x5xf32, #tpu.memory_space<vmem>>, %arg3: memref<8x1xf32, #tpu.memory_space<vmem>>, %arg4: memref<1x1xf32, #tpu.memory_space<vmem>>) attributes {dimension_semantics = [#tpu.dimension_semantics<arbitrary>], iteration_bounds = array<i64: 1>, scalar_prefetch = 0 : i64, scratch_operands = 0 : i64, tpu.core_type = #tpu.core_type<tc>, window_params = [{transform_indices = @transform_0, window_bounds = array<i64: 8, 5>}, {transform_indices = @transform_1, window_bounds = array<i64: 8, 5>}, {transform_indices = @transform_2, window_bounds = array<i64: 8, 1>}, {pipeline_mode = #tpu.pipeline_mode<synchronous>, transform_indices = @transform_3, window_bounds = array<i64: 1, 1>}]} {
    %c0_i32 = arith.constant 0 : i32
    %0 = arith.cmpi eq, %arg0, %c0_i32 : i32
    %1 = arith.extui %0 : i1 to i32
    %c0_i32_0 = arith.constant 0 : i32
    %2 = arith.cmpi ne, %1, %c0_i32_0 : i32
    scf.if %2 {
      %cst_18 = arith.constant 0.000000e+00 : f32
      %39 = vector.broadcast %cst_18 : f32 to vector<1x1xf32>
      %c0_19 = arith.constant 0 : index
      %c0_20 = arith.constant 0 : index
      %40 = vector.load %arg4[%c0_19, %c0_20] : memref<1x1xf32, #tpu.memory_space<vmem>>, vector<1x1xf32>
      tpu.vector_store %arg4[%c0_19, %c0_20], %39 {strides = array<i32>} : memref<1x1xf32, #tpu.memory_space<vmem>>, vector<1x1xf32>,
    } else {
    }
    %c0 = arith.constant 0 : index
    %c0_1 = arith.constant 0 : index
    %3 = vector.load %arg1[%c0, %c0_1] : memref<8x5xf32, #tpu.memory_space<vmem>>, vector<8x5xf32>
    %c0_2 = arith.constant 0 : index
    %c0_3 = arith.constant 0 : index
    %4 = vector.load %arg2[%c0_2, %c0_3] : memref<8x5xf32, #tpu.memory_space<vmem>>, vector<8x5xf32>
    %5 = arith.subf %3, %4 : vector<8x5xf32>
    %cst = arith.constant 9.99999997E-7 : f32
    %6 = vector.broadcast %cst : f32 to vector<8x5xf32>
    %7 = arith.addf %5, %6 : vector<8x5xf32>
    %8 = arith.mulf %7, %7 : vector<8x5xf32>
    %cst_4 = arith.constant dense<0.000000e+00> : vector<8xf32>
    %9 = vector.multi_reduction <add>, %8, %cst_4 [1] : vector<8x5xf32> to vector<8xf32>
    %10 = vector.shape_cast %9 : vector<8xf32> to vector<8x1xf32>
    %11 = math.sqrt %10 : vector<8x1xf32>
    %c0_5 = arith.constant 0 : index
    %c0_6 = arith.constant 0 : index
    %12 = vector.load %arg3[%c0_5, %c0_6] : memref<8x1xf32, #tpu.memory_space<vmem>>, vector<8x1xf32>
    %cst_7 = arith.constant 2.000000e+00 : f32
    %13 = vector.broadcast %cst_7 : f32 to vector<8x1xf32>
    %14 = arith.subf %13, %11 : vector<8x1xf32>
    %cst_8 = arith.constant 0.000000e+00 : f32
    %15 = vector.broadcast %cst_8 : f32 to vector<8x1xf32>
    %16 = arith.maximumf %14, %15 : vector<8x1xf32>
    %cst_9 = arith.constant 1.000000e+00 : f32
    %17 = vector.broadcast %cst_9 : f32 to vector<8x1xf32>
    %18 = arith.subf %17, %12 : vector<8x1xf32>
    %19 = arith.mulf %18, %10 : vector<8x1xf32>
    %20 = arith.mulf %12, %16 : vector<8x1xf32>
    %21 = arith.mulf %20, %16 : vector<8x1xf32>
    %22 = arith.addf %19, %21 : vector<8x1xf32>
    %23 = tpu.iota {dimensions = array<i32: 0>} : vector<8x1xi32>
    %c8_i32 = arith.constant 8 : i32
    %24 = arith.muli %arg0, %c8_i32 : i32
    %25 = vector.broadcast %24 : i32 to vector<8x1xi32>
    %26 = arith.addi %23, %25 : vector<8x1xi32>
    %c6_i32 = arith.constant 6 : i32
    %27 = vector.broadcast %c6_i32 : i32 to vector<8x1xi32>
    %28 = arith.cmpi slt, %26, %27 : vector<8x1xi32>
    %cst_10 = arith.constant 0.000000e+00 : f32
    %29 = vector.broadcast %cst_10 : f32 to vector<8x1xf32>
    %30 = arith.select %28, %22, %29 : vector<8x1xi1>, vector<8x1xf32>
    %c0_11 = arith.constant 0 : index
    %c0_12 = arith.constant 0 : index
    %31 = vector.load %arg4[%c0_11, %c0_12] : memref<1x1xf32, #tpu.memory_space<vmem>>, vector<1x1xf32>
    %cst_13 = arith.constant dense<0.000000e+00> : vector<1xf32>
    %32 = vector.multi_reduction <add>, %30, %cst_13 [0] : vector<8x1xf32> to vector<1xf32>
    %33 = vector.shape_cast %32 : vector<1xf32> to vector<1x1xf32>
    %34 = arith.addf %31, %33 : vector<1x1xf32>
    %c0_14 = arith.constant 0 : index
    %c0_15 = arith.constant 0 : index
    %35 = vector.load %arg4[%c0_14, %c0_15] : memref<1x1xf32, #tpu.memory_space<vmem>>, vector<1x1xf32>
    tpu.vector_store %arg4[%c0_14, %c0_15], %34 {strides = array<i32>} : memref<1x1xf32, #tpu.memory_space<vmem>>, vector<1x1xf32>,
    %c0_i32_16 = arith.constant 0 : i32
    %36 = arith.cmpi eq, %arg0, %c0_i32_16 : i32
    %37 = arith.extui %36 : i1 to i32
    %c0_i32_17 = arith.constant 0 : i32
    %38 = arith.cmpi ne, %37, %c0_i32_17 : i32
    scf.if %38 {
      %c0_18 = arith.constant 0 : index
      %c0_19 = arith.constant 0 : index
      %39 = vector.load %arg4[%c0_18, %c0_19] : memref<1x1xf32, #tpu.memory_space<vmem>>, vector<1x1xf32>
      %cst_20 = arith.constant 0.166666672 : f32
      %40 = vector.broadcast %cst_20 : f32 to vector<1x1xf32>
      %41 = arith.mulf %39, %40 : vector<1x1xf32>
      %c0_21 = arith.constant 0 : index
      %c0_22 = arith.constant 0 : index
      %42 = vector.load %arg4[%c0_21, %c0_22] : memref<1x1xf32, #tpu.memory_space<vmem>>, vector<1x1xf32>
      tpu.vector_store %arg4[%c0_21, %c0_22], %41 {strides = array<i32>} : memref<1x1xf32, #tpu.memory_space<vmem>>, vector<1x1xf32>,
    } else {
    }
    return
  }
  func.func @transform_0(%arg0: i32) -> (i32, i32) {
    %c0_i32 = arith.constant 0 : i32
    %c0_i32_0 = arith.constant 0 : i32
    return %arg0, %c0_i32 : i32, i32
  }
  func.func @transform_1(%arg0: i32) -> (i32, i32) {
    %c0_i32 = arith.constant 0 : i32
    %c0_i32_0 = arith.constant 0 : i32
    return %arg0, %c0_i32 : i32, i32
  }
  func.func @transform_2(%arg0: i32) -> (i32, i32) {
    %c0_i32 = arith.constant 0 : i32
    %c0_i32_0 = arith.constant 0 : i32
    return %arg0, %c0_i32 : i32, i32
  }
  func.func @transform_3(%arg0: i32) -> (i32, i32) {
    %c0_i32 = arith.constant 0 : i32
    %c0_i32_0 = arith.constant 0 : i32
    %c0_i32_1 = arith.constant 0 : i32
    return %c0_i32, %c0_i32_0 : i32, i32
  }
}

</mosaic_0001>

<llo_original>
// kernel: contrastive_loss.1
$region0: #{contrastive_loss.1}
  #allocation0 [shape = 'u32[]', space=smem, size = 0x4, offset = 0x4, fixed_abs, tag = 'smem constant byte address 0x4 - core index']
  #allocation1 [shape = 'u32[144,128]{1,0:T(1,128)}', space=vmem, size = 0x12000, scoped, tag = 'internal scratch']
  %s0 = inlined_call_operand.vmem [shape: f32[8,5], index: 0, kind: input, shape index: {}]
  %s1 = inlined_call_operand.vmem [shape: f32[8,5], index: 1, kind: input, shape index: {}]
  %s2 = inlined_call_operand.vmem [shape: f32[8,1], index: 2, kind: input, shape index: {}]
  %s3 = inlined_call_operand.hbm [shape: f32[1,1], index: 3, kind: output, shape index: {}]
  %s4 = sld [smem:[#allocation0]]
  $region30: #{contrastive_loss.1} parent=0
    _
  %s6 = ssub.s32 1, %s4
  %s7 = scalar_select 0, %s6, %s4
  $region1: #{contrastive_loss.1} parent=0
    #allocation2 [shape = 'u8[512]{0}', space=vmem, size = 0x400, scoped, tag = 'output window, operand 0, single buffered']
    #allocation3 [shape = 's32[1]{0}', space=sflag, size = 0x4, scoped, tag = 'scoped memory for contrastive_loss.1']
    %8 = vsyncpa [#allocation3], 0
    // Predicated region
    $region2: #{contrastive_loss.1} parent=1 // pred_check
      _
    $region3: #{contrastive_loss.1} parent=1 // pred_check_branch
      %10 = sbr.rel (0) target = $region5
    $region4: #{contrastive_loss.1} parent=1 // pred_region
      _
    $region5: #{contrastive_loss.1} parent=1 // pred_fallthru
      _
    // Predicated region
    $region6: #{contrastive_loss.1} parent=1 // pred_check
      _
    $region7: #{contrastive_loss.1} parent=1 // pred_check_branch
      %12 = sbr.rel (0) target = $region9
    $region8: #{contrastive_loss.1} parent=1 // pred_region
      _
    $region9: #{contrastive_loss.1} parent=1 // pred_fallthru
      _
    // Predicated region
    $region10: #{contrastive_loss.1} parent=1 // pred_check
      _
    $region11: #{contrastive_loss.1} parent=1 // pred_check_branch
      %14 = sbr.rel (0) target = $region13
    $region12: #{contrastive_loss.1} parent=1 // pred_region
      _
    $region13: #{contrastive_loss.1} parent=1 // pred_fallthru
      _
    %p15 = scmp.eq.s32.totalorder 0, 0
    // Predicated region
    $region14: #{contrastive_loss.1} parent=1 // pred_check
      %p16 = pneg %p15
    $region15: #{contrastive_loss.1} parent=1 // pred_check_branch
      %18 = sbr.rel (%p16) target = $region17
    $region16: #{contrastive_loss.1} parent=1 // pred_region
      %vm19 = vcmask 0
      %20 = vst.msk [vmem:[#allocation2] sm:$0x1] %vm19, 0.0
    $region17: #{contrastive_loss.1} parent=1 // pred_fallthru
      _
    %v21 = vld [vmem:[%s0] sm:$0xff]
    %v22 = vld [vmem:[%s1] sm:$0xff]
    %v23 = vsub.f32 %v21, %v22
    %v24 = vadd.f32 %v23, 1e-06
    %v25 = vmul.f32 %v24, %v24
    %vm26 = vcmask 39936
    %v27 = vsel %vm26, %v25, 0.0
    %28 = vadd.xlane.f32.xlu0 %v27
    %v29 = vpop.xlane.xlu0 %28
    %v30 = vrsqrt.pop %v29
    %v31 = vmul.f32 %v29, %v30
    %vm32 = vcmp.eq.f32.partialorder %v29, inf
    %v33 = vsel %vm32, %v29, %v31
    %vm34 = vcmp.eq.f32.partialorder %v29, 0.0
    %v35 = vand.u32 %v29, 2147483648
    %v36 = vsel %vm34, %v35, %v33
    %v37 = vld [vmem:[%s2] sm:$0xff]
    %v38 = vsub.f32 2.0, %v36
    %v39 = vmax.f32 %v38, 0.0
    %v40 = vsub.f32 1.0, %v37
    %v41 = vmul.f32 %v40, %v29
    %v42 = vmul.f32 %v37, %v39
    %v43 = vmul.f32 %v42, %v39
    %v44 = vadd.f32 %v41, %v43
    %v45 = vlaneseq
    %v46 = vshrl.u32 %v45, 7
    %s47 = smul.u32 0, 8
    %v48 = vstv %s47
    %v49 = vadd.s32 %v46, %v48
    %vm50 = vcmp.lt.s32.totalorder %v49, 6
    %v51 = vsel %vm50, %v44, 0.0
    %v52 = vld [vmem:[#allocation2] sm:$0x1]
    %vm53 = vcmask 7168
    %v54 = vsel %vm53, %v51, 0.0
    %v55 = vrot.slane %v54, 4
    %v56 = vadd.f32 %v54, %v55
    %v57 = vrot.slane %v56, 2
    %v58 = vadd.f32 %v56, %v57
    %v59 = vrot.slane %v58, 1
    %v60 = vadd.f32 %v58, %v59
    %v61 = vadd.f32 %v52, %v60
    %vm62 = vcmask 0
    %63 = vst.msk [vmem:[#allocation2] sm:$0x1] %vm62, %v61
    // Predicated region
    $region18: #{contrastive_loss.1} parent=1 // pred_check
      %p64 = pneg %p15
    $region19: #{contrastive_loss.1} parent=1 // pred_check_branch
      %66 = sbr.rel (%p64) target = $region21
    $region20: #{contrastive_loss.1} parent=1 // pred_region
      %v67 = vld [vmem:[#allocation2] sm:$0x1]
      %v68 = vmul.f32 %v67, 0.16666667
      %69 = vst.msk [vmem:[#allocation2] sm:$0x1] %vm62, %v68
    $region21: #{contrastive_loss.1} parent=1 // pred_fallthru
      _
    // Predicated region
    $region22: #{contrastive_loss.1} parent=1 // pred_check
      _
    $region23: #{contrastive_loss.1} parent=1 // pred_check_branch
      %71 = sbr.rel (0) target = $region25
    $region24: #{contrastive_loss.1} parent=1 // pred_region
      %s73 = ssub.s32 16, 16
      %74 = vsyncadd [#allocation3], %s73
      %s76 = sshll.u32 [#allocation2], 4
      %s77 = int_to_ptr.vmem [resolvable:$true] %s76
      %79 = dma.vmem_to_hbm [thread:$0]  %s77, 16, %s3, [#allocation3]
    $region25: #{contrastive_loss.1} parent=1 // pred_fallthru
      _
    // Predicated region
    $region26: #{contrastive_loss.1} parent=1 // pred_check
      _
    $region27: #{contrastive_loss.1} parent=1 // pred_check_branch
      %81 = sbr.rel (0) target = $region29
    $region28: #{contrastive_loss.1} parent=1 // pred_region
      %82 = dma.done [#allocation3], 16
    $region29: #{contrastive_loss.1} parent=1 // pred_fallthru
      _
    %83 = vsyncpa [#allocation3], 1

</llo_original>
